<compile_context>
chip_gen: v6e
topology: v6e:2x2x1
jax: 0.10.0
libtpu: 0.0.40
codegen_flags: <defaults>
</compile_context>

<pallas_src>
import functools

import jax
import jax.numpy as jnp
from jax.experimental import pallas as pl
from jax.experimental.pallas import tpu as pltpu


def _round_up(x, m):
    return (x + m - 1) // m * m


def _cdiv(a, b):
    return (a + b - 1) // b


def _pick_tile(extent, cap):
    """Tile size along one streamed axis.

    Full extent when it fits under `cap` (full-dim blocks are exempt from the
    (8, 128) alignment rule -> no mask, no ragged tail).  Otherwise pick the
    multiple of 8 <= cap that minimises the ragged last-tile waste (the kernel
    is streaming/DMA bound, so wasted rows are wasted bandwidth), preferring
    larger tiles on ties.
    """
    cap = max(8, int(cap))
    if extent <= cap:
        return int(extent)
    hi = (cap // 8) * 8
    lo = max(8, (hi // 2 // 8) * 8)
    best_t, best_key = hi, None
    for t in range(hi, lo - 1, -8):
        waste = (-extent) % t
        key = (waste, -t)
        if best_key is None or key < best_key:
            best_key, best_t = key, t
    return best_t


def _critic_kernel(x_ref, w1_ref, b1_ref, w2_ref, b2_ref, o_ref, acc_ref, *,
                   inv_n, n_real, tile_n, mask_n):
    # x_ref : [TB, TN, D]   (input dtype; ragged N tail handled by mask_n)
    # w1_ref: [D, Dp]       (already transposed, possibly bf16: y = frame @ w1)
    # b1_ref: [1, Dp] f32   w2_ref: [1, Dp] f32 (fcn2 weight row, zero padded)
    # b2_ref: [1]  f32 SMEM o_ref : [TB, 128]   acc_ref: [TB, D] f32 scratch
    j = pl.program_id(1)

    @pl.when(j == 0)
    def _():
        acc_ref[...] = jnp.zeros_like(acc_ref)

    x = x_ref[...]
    if x.dtype != jnp.float32:
        x = x.astype(jnp.float32)  # real VALU cast only for sub-f32 inputs
    if mask_n:
        # Ragged last N tile: contents past the real N are undefined, so zero
        # them BEFORE they enter the f32 partial sum.
        n_idx = jax.lax.broadcasted_iota(jnp.int32, x.shape, 1)
        x = jnp.where(n_idx < (n_real - j * tile_n), x, 0.0)

    # Incremental sum over the node/sequence axis for this tile (f32 acc).
    acc_ref[...] += jnp.sum(x, axis=1)

    @pl.when(j == pl.num_programs(1) - 1)
    def _():
        # Mean over N (masked / unread node rows contribute exact zeros).
        frame = acc_ref[...] * inv_n                              # [TB, D] f32

        # fcn1 + relu on the MXU (operand in the weight dtype, f32 accumulate).
        h = jnp.dot(frame.astype(w1_ref.dtype), w1_ref[...],
                    preferred_element_type=jnp.float32)           # [TB, Dp]
        h = jnp.maximum(h + b1_ref[...], 0.0)

        # fcn2: width-1 output -> VPU multiply + lane reduce (skip the MXU).
        out = jnp.sum(h * w2_ref[...], axis=-1, keepdims=True)    # [TB, 1]
        out = out + b2_ref[0]

        # Lane-dense, unmasked store: broadcast the per-row scalar over 128
        # lanes; the wrapper reads column 0 back out.
        o_ref[...] = jnp.broadcast_to(out, o_ref.shape).astype(o_ref.dtype)


def critic_forward(encoder_output, w1, b1, w2, b2, *, mxu_dtype=jnp.bfloat16):
    """encoder_output: [B, N, D]; weights in torch nn.Linear layout:
       w1: [D, D] (out, in), b1: [D], w2: [1, D], b2: [1].
       Returns the squeezed critic value ([B], or 0-d scalar when B == 1)."""
    B, N, D = encoder_output.shape
    itemsize = jnp.dtype(encoder_output.dtype).itemsize
    Dp = _round_up(D, 128)

    # ---- tile selection ------------------------------------------------------
    # Conservative double-buffered x budget: fits v5e/v6e scoped limits and
    # v7x's 64 MiB physical VMEM with room for weights + scratch + slack.
    x_bytes_budget = 24 << 20

    TB = _pick_tile(B, 128)
    # v7x megacore: keep >= 2 programs on the "parallel" batch axis when the
    # batch is big enough to split (harmless on single-TC v5e/v6e).
    if _cdiv(B, TB) == 1 and B >= 16:
        TB = _round_up(_cdiv(B, 2), 8)
    # Shrink the batch tile if even TN=8 would blow the x budget (huge D).
    while TB > 8 and 2 * TB * 8 * D * itemsize > x_bytes_budget:
        TB = max(8, _round_up(TB // 2, 8))

    tn_cap = max(8, min(512, x_bytes_budget // (2 * TB * D * itemsize)))
    TN = _pick_tile(N, tn_cap)

    grid = (_cdiv(B, TB), _cdiv(N, TN))
    mask_n = (N % TN) != 0

    # ---- tiny weight prep (x itself is streamed unpadded, no HBM copy) ------
    w1t_p = jnp.zeros((D, Dp), mxu_dtype).at[:, :D].set(w1.T.astype(mxu_dtype))
    b1_p = jnp.zeros((1, Dp), jnp.float32).at[0, :D].set(b1.astype(jnp.float32))
    w2_p = jnp.zeros((1, Dp), jnp.float32).at[0, :D].set(
        w2.reshape(-1).astype(jnp.float32))
    b2_p = jnp.reshape(b2, (1,)).astype(jnp.float32)

    kernel = functools.partial(_critic_kernel, inv_n=float(1.0 / N),
                               n_real=N, tile_n=TN, mask_n=mask_n)

    resident = pl.Buffered(1)  # constant index_map -> DMA once, single buffer
    grid_spec = pltpu.PrefetchScalarGridSpec(
        num_scalar_prefetch=0,
        grid=grid,
        in_specs=[
            # streamed activation tiles (real D last dim: full-dim block)
            pl.BlockSpec((TB, TN, D), lambda i, j: (i, j, 0)),
            # weights / biases resident across the whole grid
            pl.BlockSpec((D, Dp), lambda i, j: (0, 0), pipeline_mode=resident),
            pl.BlockSpec((1, Dp), lambda i, j: (0, 0), pipeline_mode=resident),
            pl.BlockSpec((1, Dp), lambda i, j: (0, 0), pipeline_mode=resident),
            # scalar bias of fcn2 lives in SMEM
            pl.BlockSpec(memory_space=pltpu.MemorySpace.SMEM),
        ],
        out_specs=pl.BlockSpec((TB, 128), lambda i, j: (i, 0)),
        scratch_shapes=[pltpu.VMEM((TB, D), jnp.float32)],
    )

    # ---- explicit VMEM budget + honest cost hint -----------------------------
    w1_bytes = D * Dp * jnp.dtype(mxu_dtype).itemsize
    vmem_est = (2 * TB * TN * D * itemsize      # double-buffered x tiles
                + w1_bytes + 2 * Dp * 4         # single-buffered weights/biases
                + 2 * TB * 128 * 4              # double-buffered output tiles
                + TB * max(D, 128) * 4)         # f32 accumulator scratch
    vmem_limit = max(2 * vmem_est, 32 << 20)
    vmem_limit = min(vmem_limit, 48 << 20)      # stay well inside v7x's 64 MiB
    vmem_limit = int(max(vmem_limit, vmem_est + (4 << 20)))

    cost = pl.CostEstimate(
        flops=B * N * D + 2 * B * D * Dp + 4 * B * Dp,
        transcendentals=0,
        bytes_accessed=(B * N * D * itemsize    # real (unpadded) x stream
                        + w1_bytes + 2 * Dp * 4 + 4
                        + B * 128 * 4),
    )

    out_p = pl.pallas_call(
        kernel,
        out_shape=jax.ShapeDtypeStruct((B, 128), jnp.float32),
        grid_spec=grid_spec,
        compiler_params=pltpu.CompilerParams(
            dimension_semantics=("parallel", "arbitrary"),
            vmem_limit_bytes=vmem_limit),
        cost_estimate=cost,
    )(encoder_output, w1t_p, b1_p, w2_p, b2_p)

    # Column 0 of the lane-broadcast output; squeeze like torch's .squeeze().
    return jnp.squeeze(out_p[:, 0])


def init_params(key, d_model):
    """Deterministic init mimicking nn.Linear default (uniform +-1/sqrt(fan_in)),
    stored in the torch layout (w: [out, in])."""
    k1, k2, k3, k4 = jax.random.split(key, 4)
    bound = 1.0 / jnp.sqrt(d_model)
    w1 = jax.random.uniform(k1, (d_model, d_model), jnp.float32, -bound, bound)
    b1 = jax.random.uniform(k2, (d_model,), jnp.float32, -bound, bound)
    w2 = jax.random.uniform(k3, (1, d_model), jnp.float32, -bound, bound)
    b2 = jax.random.uniform(k4, (1,), jnp.float32, -bound, bound)
    return w1, b1, w2, b2


if __name__ == "__main__":
    key = jax.random.PRNGKey(0)
    k_x, k_p = jax.random.split(key)

    # batch=10, num_nodes(seq)=12, d_model=32 -> exercises ragged (non 8/128
    # aligned) B/N handling with NO padded HBM copy and a D that only pads the
    # tiny weight side.
    B, N, D = 10, 12, 32
    encoder_output = jax.random.normal(k_x, (B, N, D), jnp.float32)
    w1, b1, w2, b2 = init_params(k_p, D)

    # Pure-JAX reference (torch nn.Linear semantics).
    frame = jnp.mean(encoder_output, axis=1)
    ref = jnp.squeeze(jnp.maximum(frame @ w1.T + b1, 0.0) @ w2.T + b2)

    # Full-precision weight path: tight-ish check (MXU f32 handling is shared
    # with the XLA reference, so only accumulation-order noise remains).
    out_f32 = jax.block_until_ready(
        critic_forward(encoder_output, w1, b1, w2, b2, mxu_dtype=jnp.float32))
    assert out_f32.shape == (B,), out_f32.shape
    assert jnp.allclose(out_f32, ref, atol=1e-2, rtol=1e-2), (out_f32, ref)

    # Default (recommended) path: W1 staged as bf16 with f32 accumulation.
    out_bf16 = jax.block_until_ready(
        critic_forward(encoder_output, w1, b1, w2, b2))
    assert out_bf16.shape == (B,), out_bf16.shape
    assert jnp.allclose(out_bf16, ref, atol=3e-2, rtol=3e-2), (out_bf16, ref)

    print("KERNEL_OK")
</pallas_src>

<mosaic_0001>
module attributes {stable_mosaic.version = 11 : i64} {
  func.func @_critic_kernel(%arg0: i32, %arg1: i32, %arg2: memref<10x12x32xf32, #tpu.memory_space<vmem>>, %arg3: memref<32x128xf32, #tpu.memory_space<vmem>>, %arg4: memref<1x128xf32, #tpu.memory_space<vmem>>, %arg5: memref<1x128xf32, #tpu.memory_space<vmem>>, %arg6: memref<1xf32, #tpu.memory_space<smem>>, %arg7: memref<10x128xf32, #tpu.memory_space<vmem>>, %arg8: memref<10x32xf32, #tpu.memory_space<vmem>>) attributes {dimension_semantics = [#tpu.dimension_semantics<parallel>, #tpu.dimension_semantics<arbitrary>], iteration_bounds = array<i64: 1, 1>, scalar_prefetch = 0 : i64, scratch_operands = 1 : i64, tpu.core_type = #tpu.core_type<tc>, window_params = [{transform_indices = @transform_0, window_bounds = array<i64: 10, 12, 32>}, {pipeline_mode = #tpu.pipeline_mode<synchronous>, transform_indices = @transform_1, window_bounds = array<i64: 32, 128>}, {pipeline_mode = #tpu.pipeline_mode<synchronous>, transform_indices = @transform_2, window_bounds = array<i64: 1, 128>}, {pipeline_mode = #tpu.pipeline_mode<synchronous>, transform_indices = @transform_3, window_bounds = array<i64: 1, 128>}, {transform_indices = @transform_4, window_bounds = array<i64: 1>}, {transform_indices = @transform_5, window_bounds = array<i64: 10, 128>}]} {
    %c0_i32 = arith.constant 0 : i32
    %0 = arith.cmpi eq, %arg1, %c0_i32 : i32
    %1 = arith.extui %0 : i1 to i32
    %c0_i32_0 = arith.constant 0 : i32
    %2 = arith.cmpi ne, %1, %c0_i32_0 : i32
    scf.if %2 {
      %cst_9 = arith.constant 0.000000e+00 : f32
      %11 = vector.broadcast %cst_9 : f32 to vector<10x32xf32>
      %c0_10 = arith.constant 0 : index
      %c0_11 = arith.constant 0 : index
      %12 = vector.load %arg8[%c0_10, %c0_11] : memref<10x32xf32, #tpu.memory_space<vmem>>, vector<10x32xf32>
      tpu.vector_store %arg8[%c0_10, %c0_11], %11 {strides = array<i32>} : memref<10x32xf32, #tpu.memory_space<vmem>>, vector<10x32xf32>,
    } else {
    }
    %c0 = arith.constant 0 : index
    %c0_1 = arith.constant 0 : index
    %c0_2 = arith.constant 0 : index
    %3 = vector.load %arg2[%c0, %c0_1, %c0_2] : memref<10x12x32xf32, #tpu.memory_space<vmem>>, vector<10x12x32xf32>
    %c0_3 = arith.constant 0 : index
    %c0_4 = arith.constant 0 : index
    %4 = vector.load %arg8[%c0_3, %c0_4] : memref<10x32xf32, #tpu.memory_space<vmem>>, vector<10x32xf32>
    %cst = arith.constant dense<0.000000e+00> : vector<10x32xf32>
    %5 = vector.multi_reduction <add>, %3, %cst [1] : vector<10x12x32xf32> to vector<10x32xf32>
    %6 = arith.addf %4, %5 : vector<10x32xf32>
    %c0_5 = arith.constant 0 : index
    %c0_6 = arith.constant 0 : index
    %7 = vector.load %arg8[%c0_5, %c0_6] : memref<10x32xf32, #tpu.memory_space<vmem>>, vector<10x32xf32>
    tpu.vector_store %arg8[%c0_5, %c0_6], %6 {strides = array<i32>} : memref<10x32xf32, #tpu.memory_space<vmem>>, vector<10x32xf32>,
    %c0_i32_7 = arith.constant 0 : i32
    %8 = arith.cmpi eq, %arg1, %c0_i32_7 : i32
    %9 = arith.extui %8 : i1 to i32
    %c0_i32_8 = arith.constant 0 : i32
    %10 = arith.cmpi ne, %9, %c0_i32_8 : i32
    scf.if %10 {
      %c0_9 = arith.constant 0 : index
      %c0_10 = arith.constant 0 : index
      %11 = vector.load %arg8[%c0_9, %c0_10] : memref<10x32xf32, #tpu.memory_space<vmem>>, vector<10x32xf32>
      %cst_11 = arith.constant 0.0833333358 : f32
      %12 = vector.broadcast %cst_11 : f32 to vector<10x32xf32>
      %13 = arith.mulf %11, %12 : vector<10x32xf32>
      %c0_12 = arith.constant 0 : index
      %c0_13 = arith.constant 0 : index
      %14 = vector.load %arg3[%c0_12, %c0_13] : memref<32x128xf32, #tpu.memory_space<vmem>>, vector<32x128xf32>
      %cst_14 = arith.constant dense<0.000000e+00> : vector<10x128xf32>
      %15 = tpu.matmul %13, %14, %cst_14 {dimension_numbers = #tpu.dot_dimension_numbers<[1], [0], [0], [1], [0, 0, 1, 1], [], []>} : vector<10x32xf32>, vector<32x128xf32>, vector<10x128xf32> -> vector<10x128xf32>
      %c0_15 = arith.constant 0 : index
      %c0_16 = arith.constant 0 : index
      %16 = vector.load %arg4[%c0_15, %c0_16] : memref<1x128xf32, #tpu.memory_space<vmem>>, vector<1x128xf32>
      %17 = vector.broadcast %16 : vector<1x128xf32> to vector<10x128xf32>
      %18 = arith.addf %15, %17 : vector<10x128xf32>
      %cst_17 = arith.constant 0.000000e+00 : f32
      %19 = vector.broadcast %cst_17 : f32 to vector<10x128xf32>
      %20 = arith.maximumf %18, %19 : vector<10x128xf32>
      %c0_18 = arith.constant 0 : index
      %c0_19 = arith.constant 0 : index
      %21 = vector.load %arg5[%c0_18, %c0_19] : memref<1x128xf32, #tpu.memory_space<vmem>>, vector<1x128xf32>
      %22 = vector.broadcast %21 : vector<1x128xf32> to vector<10x128xf32>
      %23 = arith.mulf %20, %22 : vector<10x128xf32>
      %cst_20 = arith.constant dense<0.000000e+00> : vector<10xf32>
      %24 = vector.multi_reduction <add>, %23, %cst_20 [1] : vector<10x128xf32> to vector<10xf32>
      %25 = vector.shape_cast %24 : vector<10xf32> to vector<10x1xf32>
      %c0_21 = arith.constant 0 : index
      %26 = memref.load %arg6[%c0_21] : memref<1xf32, #tpu.memory_space<smem>>
      %27 = vector.broadcast %26 : f32 to vector<10x1xf32>
      %28 = arith.addf %25, %27 : vector<10x1xf32>
      %29 = vector.shape_cast %28 : vector<10x1xf32> to vector<10x1xf32>
      %30 = vector.broadcast %29 : vector<10x1xf32> to vector<10x128xf32>
      %c0_22 = arith.constant 0 : index
      %c0_23 = arith.constant 0 : index
      %31 = vector.load %arg7[%c0_22, %c0_23] : memref<10x128xf32, #tpu.memory_space<vmem>>, vector<10x128xf32>
      tpu.vector_store %arg7[%c0_22, %c0_23], %30 {strides = array<i32>} : memref<10x128xf32, #tpu.memory_space<vmem>>, vector<10x128xf32>,
    } else {
    }
    return
  }
  func.func @transform_0(%arg0: i32, %arg1: i32) -> (i32, i32, i32) {
    %c0_i32 = arith.constant 0 : i32
    %c0_i32_0 = arith.constant 0 : i32
    return %arg0, %arg1, %c0_i32 : i32, i32, i32
  }
  func.func @transform_1(%arg0: i32, %arg1: i32) -> (i32, i32) {
    %c0_i32 = arith.constant 0 : i32
    %c0_i32_0 = arith.constant 0 : i32
    %c0_i32_1 = arith.constant 0 : i32
    return %c0_i32, %c0_i32_0 : i32, i32
  }
  func.func @transform_2(%arg0: i32, %arg1: i32) -> (i32, i32) {
    %c0_i32 = arith.constant 0 : i32
    %c0_i32_0 = arith.constant 0 : i32
    %c0_i32_1 = arith.constant 0 : i32
    return %c0_i32, %c0_i32_0 : i32, i32
  }
  func.func @transform_3(%arg0: i32, %arg1: i32) -> (i32, i32) {
    %c0_i32 = arith.constant 0 : i32
    %c0_i32_0 = arith.constant 0 : i32
    %c0_i32_1 = arith.constant 0 : i32
    return %c0_i32, %c0_i32_0 : i32, i32
  }
  func.func @transform_4(%arg0: i32, %arg1: i32) -> i32 {
    %c0_i32 = arith.constant 0 : i32
    %c0_i32_0 = arith.constant 0 : i32
    return %c0_i32 : i32
  }
  func.func @transform_5(%arg0: i32, %arg1: i32) -> (i32, i32) {
    %c0_i32 = arith.constant 0 : i32
    %c0_i32_0 = arith.constant 0 : i32
    return %arg0, %c0_i32 : i32, i32
  }
}

</mosaic_0001>

<llo_original>
// kernel: tpu_custom_call.1
$region0: #{tpu_custom_call.1}
  #allocation0 [shape = 'u32[]', space=smem, size = 0x4, offset = 0x4, fixed_abs, tag = 'smem constant byte address 0x4 - core index']
  #allocation1 [shape = 'u32[144,128]{1,0:T(1,128)}', space=vmem, size = 0x12000, scoped, tag = 'internal scratch']
  #allocation2 [shape = 'f32[10,32]{1,0:T(8,128)}', space=vmem, size = 0x2000, scoped, tag = 'scratch operand']
  #allocation3 [shape = 'f32[1]{0:T(128)S(6)}', space=smem, size = 0x200, scoped, tag = 'scoped memory for tpu_custom_call.1']
  %s0 = inlined_call_operand.hbm [shape: f32[10,12,32], index: 0, kind: input, shape index: {}]
  %s1 = inlined_call_operand.hbm [shape: f32[32,128], index: 1, kind: input, shape index: {}]
  %s2 = inlined_call_operand.vmem [shape: f32[1,128], index: 2, kind: input, shape index: {}]
  %s3 = inlined_call_operand.vmem [shape: f32[1,128], index: 3, kind: input, shape index: {}]
  %s4 = inlined_call_operand.<no memory space> [shape: f32[1], index: 4, kind: input, shape index: {}]
  %s5 = inlined_call_operand.hbm [shape: f32[10,128], index: 5, kind: output, shape index: {}]
  %s6 = sld [smem:[#allocation0]]
  $region46: #{tpu_custom_call.1} parent=0
    _
  %s8 = ssub.s32 1, %s6
  %s9 = scalar_select 0, %s8, %s6
  %10 = sst [smem:[#allocation3]] %s4
  $region1: #{tpu_custom_call.1} parent=0
    #allocation4 [shape = 'u8[81920]{0}', space=vmem, size = 0x14000, scoped, tag = 'input window, operand 0, single buffered']
    #allocation5 [shape = 's32[1]{0}', space=sflag, size = 0x4, scoped, tag = 'scoped memory for tpu_custom_call.1']
    #allocation6 [shape = 's32[1]{0}', space=sflag, size = 0x4, scoped, tag = 'scoped memory for tpu_custom_call.1']
    #allocation7 [shape = 'u8[16384]{0}', space=vmem, size = 0x4000, scoped, tag = 'input window, operand 1, single buffered']
    #allocation8 [shape = 's32[1]{0}', space=sflag, size = 0x4, scoped, tag = 'scoped memory for tpu_custom_call.1']
    #allocation9 [shape = 'u8[8192]{0}', space=vmem, size = 0x2000, scoped, tag = 'output window, operand 0, single buffered']
    %11 = vsyncpa [#allocation5], 0
    %12 = vsyncpa [#allocation8], 0
    %13 = vsyncpa [#allocation6], 0
    // Predicated region
    $region2: #{tpu_custom_call.1} parent=1 // pred_check
      _
    $region3: #{tpu_custom_call.1} parent=1 // pred_check_branch
      %15 = sbr.rel (0) target = $region5
    $region4: #{tpu_custom_call.1} parent=1 // pred_region
      %s17 = ssub.s32 2560, 2560
      %18 = vsyncadd [#allocation5], %s17
      %s19 = sshll.u32 [#allocation4], 4
      %s20 = int_to_ptr.vmem [resolvable:$true] %s19
      %25 = dma.hbm_to_vmem [thread:$0]  %s0, 2560, %s20, [#allocation5], 128, 128, 8
    $region5: #{tpu_custom_call.1} parent=1 // pred_fallthru
      _
    // Predicated region
    $region6: #{tpu_custom_call.1} parent=1 // pred_check
      _
    $region7: #{tpu_custom_call.1} parent=1 // pred_check_branch
      %27 = sbr.rel (0) target = $region9
    $region8: #{tpu_custom_call.1} parent=1 // pred_region
      %s29 = ssub.s32 512, 512
      %30 = vsyncadd [#allocation8], %s29
      %s31 = sshll.u32 [#allocation7], 4
      %s32 = int_to_ptr.vmem [resolvable:$true] %s31
      %37 = dma.hbm_to_vmem [thread:$0]  %s1, 512, %s32, [#allocation8], 128, 128, 8
    $region9: #{tpu_custom_call.1} parent=1 // pred_fallthru
      _
    // Predicated region
    $region10: #{tpu_custom_call.1} parent=1 // pred_check
      _
    $region11: #{tpu_custom_call.1} parent=1 // pred_check_branch
      %39 = sbr.rel (0) target = $region13
    $region12: #{tpu_custom_call.1} parent=1 // pred_region
      _
    $region13: #{tpu_custom_call.1} parent=1 // pred_fallthru
      _
    // Predicated region
    $region14: #{tpu_custom_call.1} parent=1 // pred_check
      _
    $region15: #{tpu_custom_call.1} parent=1 // pred_check_branch
      %41 = sbr.rel (0) target = $region17
    $region16: #{tpu_custom_call.1} parent=1 // pred_region
      _
    $region17: #{tpu_custom_call.1} parent=1 // pred_fallthru
      _
    // Predicated region
    $region18: #{tpu_custom_call.1} parent=1 // pred_check
      _
    $region19: #{tpu_custom_call.1} parent=1 // pred_check_branch
      %43 = sbr.rel (0) target = $region21
    $region20: #{tpu_custom_call.1} parent=1 // pred_region
      _
    $region21: #{tpu_custom_call.1} parent=1 // pred_fallthru
      _
    // Predicated region
    $region22: #{tpu_custom_call.1} parent=1 // pred_check
      _
    $region23: #{tpu_custom_call.1} parent=1 // pred_check_branch
      %45 = sbr.rel (0) target = $region25
    $region24: #{tpu_custom_call.1} parent=1 // pred_region
      %46 = dma.done [#allocation5], 2560
    $region25: #{tpu_custom_call.1} parent=1 // pred_fallthru
      _
    // Predicated region
    $region26: #{tpu_custom_call.1} parent=1 // pred_check
      _
    $region27: #{tpu_custom_call.1} parent=1 // pred_check_branch
      %48 = sbr.rel (0) target = $region29
    $region28: #{tpu_custom_call.1} parent=1 // pred_region
      %49 = dma.done [#allocation8], 512
    $region29: #{tpu_custom_call.1} parent=1 // pred_fallthru
      _
    %p50 = scmp.eq.s32.totalorder 0, 0
    // Predicated region
    $region30: #{tpu_custom_call.1} parent=1 // pred_check
      %p51 = pneg %p50
    $region31: #{tpu_custom_call.1} parent=1 // pred_check_branch
      %53 = sbr.rel (%p51) target = $region33
    $region32: #{tpu_custom_call.1} parent=1 // pred_region
      %vm54 = vcmask 261120
      %55 = vst.msk [vmem:[#allocation2] sm:$0xff] %vm54, 0.0
      %vm56 = vcmask 254976
      %57 = vst.msk [vmem:[#allocation2 + $0x8] sm:$0x3] %vm56, 0.0
    $region33: #{tpu_custom_call.1} parent=1 // pred_fallthru
      _
    %v58 = vld [vmem:[#allocation4] sm:$0xff]
    %v59 = vld [vmem:[#allocation4 + $0x8] sm:$0xf]
    %v60 = vld [vmem:[#allocation4 + $0x10] sm:$0xff]
    %v61 = vld [vmem:[#allocation4 + $0x18] sm:$0xf]
    %v62 = vld [vmem:[#allocation4 + $0x20] sm:$0xff]
    %v63 = vld [vmem:[#allocation4 + $0x28] sm:$0xf]
    %v64 = vld [vmem:[#allocation4 + $0x30] sm:$0xff]
    %v65 = vld [vmem:[#allocation4 + $0x38] sm:$0xf]
    %v66 = vld [vmem:[#allocation4 + $0x40] sm:$0xff]
    %v67 = vld [vmem:[#allocation4 + $0x48] sm:$0xf]
    %v68 = vld [vmem:[#allocation4 + $0x50] sm:$0xff]
    %v69 = vld [vmem:[#allocation4 + $0x58] sm:$0xf]
    %v70 = vld [vmem:[#allocation4 + $0x60] sm:$0xff]
    %v71 = vld [vmem:[#allocation4 + $0x68] sm:$0xf]
    %v72 = vld [vmem:[#allocation4 + $0x70] sm:$0xff]
    %v73 = vld [vmem:[#allocation4 + $0x78] sm:$0xf]
    %v74 = vld [vmem:[#allocation4 + $0x80] sm:$0xff]
    %v75 = vld [vmem:[#allocation4 + $0x88] sm:$0xf]
    %v76 = vld [vmem:[#allocation4 + $0x90] sm:$0xff]
    %v77 = vld [vmem:[#allocation4 + $0x98] sm:$0xf]
    %v78 = vld [vmem:[#allocation2] sm:$0xff]
    %v79 = vld [vmem:[#allocation2 + $0x8] sm:$0x3]
    %vm80 = vcmask 261120
    %v81 = vsel %vm80, %v58, 0.0
    %vm82 = vcmask 257024
    %v83 = vsel %vm82, %v59, 0.0
    %v84 = vadd.f32 %v81, %v83
    %v85 = vrot.slane %v84, 4
    %v86 = vadd.f32 %v84, %v85
    %v87 = vrot.slane %v86, 2
    %v88 = vadd.f32 %v86, %v87
    %v89 = vrot.slane %v88, 1
    %v90 = vadd.f32 %v88, %v89
    %v91 = vsel %vm80, %v60, 0.0
    %v92 = vsel %vm82, %v61, 0.0
    %v93 = vadd.f32 %v91, %v92
    %v94 = vrot.slane %v93, 4
    %v95 = vadd.f32 %v93, %v94
    %v96 = vrot.slane %v95, 2
    %v97 = vadd.f32 %v95, %v96
    %v98 = vrot.slane %v97, 1
    %v99 = vadd.f32 %v97, %v98
    %v100 = vsel %vm80, %v62, 0.0
    %v101 = vsel %vm82, %v63, 0.0
    %v102 = vadd.f32 %v100, %v101
    %v103 = vrot.slane %v102, 4
    %v104 = vadd.f32 %v102, %v103
    %v105 = vrot.slane %v104, 2
    %v106 = vadd.f32 %v104, %v105
    %v107 = vrot.slane %v106, 1
    %v108 = vadd.f32 %v106, %v107
    %v109 = vsel %vm80, %v64, 0.0
    %v110 = vsel %vm82, %v65, 0.0
    %v111 = vadd.f32 %v109, %v110
    %v112 = vrot.slane %v111, 4
    %v113 = vadd.f32 %v111, %v112
    %v114 = vrot.slane %v113, 2
    %v115 = vadd.f32 %v113, %v114
    %v116 = vrot.slane %v115, 1
    %v117 = vadd.f32 %v115, %v116
    %v118 = vsel %vm80, %v66, 0.0
    %v119 = vsel %vm82, %v67, 0.0
    %v120 = vadd.f32 %v118, %v119
    %v121 = vrot.slane %v120, 4
    %v122 = vadd.f32 %v120, %v121
    %v123 = vrot.slane %v122, 2
    %v124 = vadd.f32 %v122, %v123
    %v125 = vrot.slane %v124, 1
    %v126 = vadd.f32 %v124, %v125
    %v127 = vsel %vm80, %v68, 0.0
    %v128 = vsel %vm82, %v69, 0.0
    %v129 = vadd.f32 %v127, %v128
    %v130 = vrot.slane %v129, 4
    %v131 = vadd.f32 %v129, %v130
    %v132 = vrot.slane %v131, 2
    %v133 = vadd.f32 %v131, %v132
    %v134 = vrot.slane %v133, 1
    %v135 = vadd.f32 %v133, %v134
    %v136 = vsel %vm80, %v70, 0.0
    %v137 = vsel %vm82, %v71, 0.0
    %v138 = vadd.f32 %v136, %v137
    %v139 = vrot.slane %v138, 4
    %v140 = vadd.f32 %v138, %v139
    %v141 = vrot.slane %v140, 2
    %v142 = vadd.f32 %v140, %v141
    %v143 = vrot.slane %v142, 1
    %v144 = vadd.f32 %v142, %v143
    %v145 = vsel %vm80, %v72, 0.0
    %v146 = vsel %vm82, %v73, 0.0
    %v147 = vadd.f32 %v145, %v146
    %v148 = vrot.slane %v147, 4
    %v149 = vadd.f32 %v147, %v148
    %v150 = vrot.slane %v149, 2
    %v151 = vadd.f32 %v149, %v150
    %v152 = vrot.slane %v151, 1
    %v153 = vadd.f32 %v151, %v152
    %v154 = vsel %vm80, %v74, 0.0
    %v155 = vsel %vm82, %v75, 0.0
    %v156 = vadd.f32 %v154, %v155
    %v157 = vrot.slane %v156, 4
    %v158 = vadd.f32 %v156, %v157
    %v159 = vrot.slane %v158, 2
    %v160 = vadd.f32 %v158, %v159
    %v161 = vrot.slane %v160, 1
    %v162 = vadd.f32 %v160, %v161
    %v163 = vsel %vm80, %v76, 0.0
    %v164 = vsel %vm82, %v77, 0.0
    %v165 = vadd.f32 %v163, %v164
    %v166 = vrot.slane %v165, 4
    %v167 = vadd.f32 %v165, %v166
    %v168 = vrot.slane %v167, 2
    %v169 = vadd.f32 %v167, %v168
    %v170 = vrot.slane %v169, 1
    %v171 = vadd.f32 %v169, %v170
    %vm182 = vcmask 1041409
    %v183 = vsel %vm182, %v99, %v90
    %vm184 = vcmask 1042434
    %v185 = vsel %vm184, %v108, %v183
    %vm186 = vcmask 1043459
    %v187 = vsel %vm186, %v117, %v185
    %vm188 = vcmask 1044484
    %v189 = vsel %vm188, %v126, %v187
    %vm190 = vcmask 1045509
    %v191 = vsel %vm190, %v135, %v189
    %vm192 = vcmask 1046534
    %v193 = vsel %vm192, %v144, %v191
    %vm194 = vcmask 1047559
    %v195 = vsel %vm194, %v153, %v193
    %v196 = vsel %vm182, %v171, %v162
    %v199 = vadd.f32 %v78, %v195
    %v200 = vadd.f32 %v79, %v196
    %201 = vst.msk [vmem:[#allocation2] sm:$0xff] %vm80, %v199
    %vm202 = vcmask 254976
    %203 = vst.msk [vmem:[#allocation2 + $0x8] sm:$0x3] %vm202, %v200
    // Predicated region
    $region34: #{tpu_custom_call.1} parent=1 // pred_check
      %p204 = pneg %p50
    $region35: #{tpu_custom_call.1} parent=1 // pred_check_branch
      %206 = sbr.rel (%p204) target = $region37
    $region36: #{tpu_custom_call.1} parent=1 // pred_region
      %v207 = vld [vmem:[#allocation2] sm:$0xff]
      %v208 = vld [vmem:[#allocation2 + $0x8] sm:$0x3]
      %v209 = vmul.f32 %v207, 0.083333336
      %v210 = vmul.f32 %v208, 0.083333336
      %v211 = vld [vmem:[#allocation7] sm:$0xff]
      %v212 = vld [vmem:[#allocation7 + $0x8] sm:$0xff]
      %v213 = vld [vmem:[#allocation7 + $0x10] sm:$0xff]
      %v214 = vld [vmem:[#allocation7 + $0x18] sm:$0xff]
      %v215 = vld [vmem:[%s2] sm:$0x1]
      %v217 = vlaneseq
      %v218 = vshrl.u32 %v217, 7
      %v219 = vsub.s32 0, %v218
      %v220 = vrot.slane %v215, %v219
      %v223 = vsel %vm80, %v209, 0
      %v226 = vsel %vm80, %v210, 0
      %228 = vmatprep.subr.mxu0 0.0
      %229 = vmatpush1.msra.mxu0 0.0
      %230 = vmatprep.subr.mxu0 0.0
      %231 = vmatpush1.msra.mxu0 0.0
      %232 = vmatprep.subr.mxu0 0.0
      %233 = vmatpush1.msra.mxu0 0.0
      %234 = vmatprep.subr.mxu0 0.0
      %235 = vmatpush1.msra.mxu0 0.0
      %236 = vmatprep.subr.mxu0 0.0
      %237 = vmatpush1.msra.mxu0 0.0
      %238 = vmatprep.subr.mxu0 0.0
      %239 = vmatpush1.msra.mxu0 0.0
      %240 = vmatprep.subr.mxu0 0.0
      %241 = vmatpush1.msra.mxu0 0.0
      %242 = vmatprep.subr.mxu0 0.0
      %243 = vmatpush1.msra.mxu0 0.0
      %244 = vmatprep.subr.mxu0 0.0
      %245 = vmatpush1.msra.mxu0 0.0
      %246 = vmatprep.subr.mxu0 0.0
      %247 = vmatpush1.msra.mxu0 0.0
      %248 = vmatprep.subr.mxu0 0.0
      %249 = vmatpush1.msra.mxu0 0.0
      %250 = vmatprep.subr.mxu0 0.0
      %251 = vmatpush1.msra.mxu0 0.0
      %252 = vmatprep.subr.mxu0 0.0
      %253 = vmatpush1.msra.mxu0 %v214
      %254 = vmatprep.subr.mxu0 0.0
      %255 = vmatpush1.msra.mxu0 %v213
      %256 = vmatprep.subr.mxu0 0.0
      %257 = vmatpush1.msra.mxu0 %v212
      %258 = vmatprep.subr.mxu0 0.0
      %259 = vmatpush1.msra.mxu0 %v211
      %260 = vmatprep.subr.mxu0 0.0
      %261 = vmatpush2.msra.mxu0 0.0
      %262 = vmatprep.subr.mxu0 0.0
      %263 = vmatpush2.msra.mxu0 0.0
      %264 = vmatprep.subr.mxu0 0.0
      %265 = vmatpush2.msra.mxu0 0.0
      %266 = vmatprep.subr.mxu0 0.0
      %267 = vmatpush2.msra.mxu0 0.0
      %268 = vmatprep.subr.mxu0 0.0
      %269 = vmatpush2.msra.mxu0 0.0
      %270 = vmatprep.subr.mxu0 0.0
      %271 = vmatpush2.msra.mxu0 0.0
      %272 = vmatprep.subr.mxu0 0.0
      %273 = vmatpush2.msra.mxu0 0.0
      %274 = vmatprep.subr.mxu0 0.0
      %275 = vmatpush2.msra.mxu0 0.0
      %276 = vmatprep.subr.mxu0 0.0
      %277 = vmatpush2.msra.mxu0 0.0
      %278 = vmatprep.subr.mxu0 0.0
      %279 = vmatpush2.msra.mxu0 0.0
      %280 = vmatprep.subr.mxu0 0.0
      %281 = vmatpush2.msra.mxu0 0.0
      %282 = vmatprep.subr.mxu0 0.0
      %283 = vmatpush2.msra.mxu0 0.0
      %284 = vmatprep.subr.mxu0 0.0
      %285 = vmatpush2.msra.mxu0 0.0
      %286 = vmatprep.subr.mxu0 0.0
      %287 = vmatpush2.msra.mxu0 0.0
      %288 = vmatprep.subr.mxu0 0.0
      %289 = vmatpush2.msra.mxu0 0.0
      %290 = vmatprep.subr.mxu0 0.0
      %291 = vmatpush2.msra.mxu0 0.0
      %292 = vmatprep.mubr.f32.mxu0 0.0
      %293 = vmatmul.mubr.f32.gmra.mxu0 %v223
      %v294 = vpop.f32.mrf.mxu0
      %v295 = vadd.f32 %v220, %v294
      %v296 = vpop.f32.mrf.mxu0
      %297 = vmatprep.mubr.f32.mxu0 0.0
      %298 = vmatmul.mubr.f32.gmra.mxu0 %v226
      %v299 = vpop.f32.mrf.mxu0
      %v300 = vadd.f32 %v220, %v299
      %v301 = vpop.f32.mrf.mxu0
      %302 = vdwg.mxu0
      %v303 = vmax.f32 %v295, 0.0
      %v304 = vmax.f32 %v300, 0.0
      %v305 = vld [vmem:[%s3] sm:$0x1]
      %v307 = vlaneseq
      %v308 = vshrl.u32 %v307, 7
      %v309 = vsub.s32 0, %v308
      %v310 = vrot.slane %v305, %v309
      %v312 = vmul.f32 %v303, %v310
      %v313 = vmul.f32 %v304, %v310
      %314 = vadd.xlane.f32.xlu0 %v312
      %v315 = vpop.xlane.xlu0 %314
      %vm316 = vcmask 1041408
      %v317 = vsel %vm316, %v313, 0.0
      %318 = vadd.xlane.f32.xlu0 %v317
      %v319 = vpop.xlane.xlu0 %318
      %s320 = sld [smem:[#allocation3]]
      %v321 = vstv %s320
      %v322 = vadd.f32 %v315, %v321
      %v323 = vadd.f32 %v319, %v321
      %324 = vst [vmem:[#allocation9] sm:$0xff] %v322
      %325 = vst [vmem:[#allocation9 + $0x8] sm:$0x3] %v323
    $region37: #{tpu_custom_call.1} parent=1 // pred_fallthru
      _
    // Predicated region
    $region38: #{tpu_custom_call.1} parent=1 // pred_check
      _
    $region39: #{tpu_custom_call.1} parent=1 // pred_check_branch
      %327 = sbr.rel (0) target = $region41
    $region40: #{tpu_custom_call.1} parent=1 // pred_region
      %s329 = ssub.s32 256, 256
      %330 = vsyncadd [#allocation6], %s329
      %s331 = sshll.u32 [#allocation9], 4
      %s332 = int_to_ptr.vmem [resolvable:$true] %s331
      %337 = dma.vmem_to_hbm [thread:$0]  %s332, 256, %s5, [#allocation6], 128, 128, 8
    $region41: #{tpu_custom_call.1} parent=1 // pred_fallthru
      _
    // Predicated region
    $region42: #{tpu_custom_call.1} parent=1 // pred_check
      _
    $region43: #{tpu_custom_call.1} parent=1 // pred_check_branch
      %339 = sbr.rel (0) target = $region45
    $region44: #{tpu_custom_call.1} parent=1 // pred_region
      %340 = dma.done [#allocation6], 256
    $region45: #{tpu_custom_call.1} parent=1 // pred_fallthru
      _
    %341 = vsyncpa [#allocation5], 1
    %342 = vsyncpa [#allocation8], 1
    %343 = vsyncpa [#allocation6], 1

</llo_original>
